<compile_context>
chip_gen: v7x
topology: tpu7x:2x2x1
jax: 0.10.0
libtpu: 0.0.40
codegen_flags: <defaults>
</compile_context>

<pallas_src>
import jax
import jax.numpy as jnp
from jax.experimental import pallas as pl
from jax.experimental.pallas import tpu as pltpu

MIN_VALUE = 1.0
MAX_VALUE = 3.0
IN_FEATURES = 16
OUT_FEATURES = 32

# Batch-tile size for the pipelined path; per-tile VMEM is tiny (~TB*192 B),
# so TB is chosen to amortize the ~0.35 us per-grid-step overhead.
BATCH_TILE = 512
# At or below this batch size a single-block launch is cheaper than tiling+padding.
SMALL_BATCH_THRESHOLD = BATCH_TILE


def linear_clamp_kernel(x_ref, w_ref, b_ref, o_ref):
    # x_ref: (TB, 16), w_ref: (16, 32), b_ref: (1, 32), o_ref: (TB, 32)
    y = jnp.dot(x_ref[...], w_ref[...], preferred_element_type=jnp.float32)
    y = y + b_ref[...]
    y = jnp.minimum(jnp.maximum(y, MIN_VALUE), MAX_VALUE)  # clamp_min then clamp_max
    o_ref[...] = y.astype(o_ref.dtype)


def _call_kernel(x, w, b2d, tile_b, grid_b, dim_sem):
    B = x.shape[0]
    flops = 2 * B * IN_FEATURES * OUT_FEATURES
    bytes_accessed = 4 * (
        B * IN_FEATURES                     # x
        + IN_FEATURES * OUT_FEATURES        # w
        + OUT_FEATURES                      # bias
        + B * OUT_FEATURES                  # y
    )
    return pl.pallas_call(
        linear_clamp_kernel,
        out_shape=jax.ShapeDtypeStruct((B, OUT_FEATURES), x.dtype),
        grid=(grid_b,),
        in_specs=[
            pl.BlockSpec((tile_b, IN_FEATURES), lambda i: (i, 0)),
            # Parameters: same block every step -> stay resident in VMEM.
            pl.BlockSpec((IN_FEATURES, OUT_FEATURES), lambda i: (0, 0)),
            pl.BlockSpec((1, OUT_FEATURES), lambda i: (0, 0)),
        ],
        out_specs=pl.BlockSpec((tile_b, OUT_FEATURES), lambda i: (i, 0)),
        compiler_params=pltpu.CompilerParams(dimension_semantics=dim_sem),
        cost_estimate=pl.CostEstimate(
            flops=flops, transcendentals=0, bytes_accessed=bytes_accessed),
    )(x, w, b2d)


def linear_clamp(x, w, b):
    B = x.shape[0]
    b2d = b.reshape(1, OUT_FEATURES)

    if B <= SMALL_BATCH_THRESHOLD:
        # Small batch: single full-array block; grid/launch overhead dominates
        # anyway, so don't pay for padding or extra grid steps.
        return _call_kernel(x, w, b2d, tile_b=B, grid_b=1, dim_sem=("arbitrary",))

    # Large batch: tile the batch axis for double-buffered streaming of x / y.
    # Batch blocks are fully independent -> "parallel" (shards across the two
    # TensorCores on v7x; harmless on v5e/v6e).
    padded_B = pl.cdiv(B, BATCH_TILE) * BATCH_TILE
    x_in = jnp.pad(x, ((0, padded_B - B), (0, 0))) if padded_B != B else x
    out = _call_kernel(
        x_in, w, b2d,
        tile_b=BATCH_TILE,
        grid_b=padded_B // BATCH_TILE,
        dim_sem=("parallel",),
    )
    return out[:B]


if __name__ == "__main__":
    key = jax.random.PRNGKey(0)
    k_x, k_w, k_b, k_x2 = jax.random.split(key, 4)

    # Deterministic parameter init (synthetic; shapes from nn.Linear(16, 32)).
    bound = 1.0 / (IN_FEATURES ** 0.5)
    w = jax.random.uniform(k_w, (IN_FEATURES, OUT_FEATURES),
                           minval=-bound, maxval=bound, dtype=jnp.float32)
    bias = jax.random.uniform(k_b, (OUT_FEATURES,),
                              minval=-bound, maxval=bound, dtype=jnp.float32)

    # Input matching the spec: x1 = torch.randn(1, 16)  -> small-batch path.
    x1 = jax.random.normal(k_x, (1, IN_FEATURES), dtype=jnp.float32)
    out = linear_clamp(x1, w, bias)
    jax.block_until_ready(out)
    ref = jnp.clip(x1 @ w + bias, MIN_VALUE, MAX_VALUE)
    assert out.shape == (1, OUT_FEATURES)
    assert jnp.allclose(out, ref, atol=1e-5, rtol=1e-5)

    # Also exercise the tiled large-batch path, with B not a multiple of the
    # batch tile to validate the pad-and-slice handling.
    x_big = jax.random.normal(k_x2, (1000, IN_FEATURES), dtype=jnp.float32)
    out_big = linear_clamp(x_big, w, bias)
    jax.block_until_ready(out_big)
    ref_big = jnp.clip(x_big @ w + bias, MIN_VALUE, MAX_VALUE)
    assert out_big.shape == (1000, OUT_FEATURES)
    assert jnp.allclose(out_big, ref_big, atol=1e-5, rtol=1e-5)

    print("KERNEL_OK")
</pallas_src>

<mosaic_0001>
module attributes {stable_mosaic.version = 11 : i64} {
  func.func @linear_clamp_kernel(%arg0: i32, %arg1: memref<1x16xf32, #tpu.memory_space<vmem>>, %arg2: memref<16x32xf32, #tpu.memory_space<vmem>>, %arg3: memref<1x32xf32, #tpu.memory_space<vmem>>, %arg4: memref<1x32xf32, #tpu.memory_space<vmem>>) attributes {dimension_semantics = [#tpu.dimension_semantics<arbitrary>], iteration_bounds = array<i64: 1>, scalar_prefetch = 0 : i64, scratch_operands = 0 : i64, tpu.core_type = #tpu.core_type<tc>, window_params = [{transform_indices = @transform_0, window_bounds = array<i64: 1, 16>}, {pipeline_mode = #tpu.pipeline_mode<synchronous>, transform_indices = @transform_1, window_bounds = array<i64: 16, 32>}, {pipeline_mode = #tpu.pipeline_mode<synchronous>, transform_indices = @transform_2, window_bounds = array<i64: 1, 32>}, {transform_indices = @transform_3, window_bounds = array<i64: 1, 32>}]} {
    %c0 = arith.constant 0 : index
    %c0_0 = arith.constant 0 : index
    %0 = vector.load %arg1[%c0, %c0_0] : memref<1x16xf32, #tpu.memory_space<vmem>>, vector<1x16xf32>
    %c0_1 = arith.constant 0 : index
    %c0_2 = arith.constant 0 : index
    %1 = vector.load %arg2[%c0_1, %c0_2] : memref<16x32xf32, #tpu.memory_space<vmem>>, vector<16x32xf32>
    %cst = arith.constant dense<0.000000e+00> : vector<1x32xf32>
    %2 = tpu.matmul %0, %1, %cst {dimension_numbers = #tpu.dot_dimension_numbers<[1], [0], [0], [1], [0, 0, 1, 1], [], []>} : vector<1x16xf32>, vector<16x32xf32>, vector<1x32xf32> -> vector<1x32xf32>
    %c0_3 = arith.constant 0 : index
    %c0_4 = arith.constant 0 : index
    %3 = vector.load %arg3[%c0_3, %c0_4] : memref<1x32xf32, #tpu.memory_space<vmem>>, vector<1x32xf32>
    %4 = arith.addf %2, %3 : vector<1x32xf32>
    %cst_5 = arith.constant 1.000000e+00 : f32
    %5 = vector.broadcast %cst_5 : f32 to vector<1x32xf32>
    %6 = arith.maximumf %4, %5 : vector<1x32xf32>
    %cst_6 = arith.constant 3.000000e+00 : f32
    %7 = vector.broadcast %cst_6 : f32 to vector<1x32xf32>
    %8 = arith.minimumf %6, %7 : vector<1x32xf32>
    %c0_7 = arith.constant 0 : index
    %c0_8 = arith.constant 0 : index
    %9 = vector.load %arg4[%c0_7, %c0_8] : memref<1x32xf32, #tpu.memory_space<vmem>>, vector<1x32xf32>
    tpu.vector_store %arg4[%c0_7, %c0_8], %8 {strides = array<i32>} : memref<1x32xf32, #tpu.memory_space<vmem>>, vector<1x32xf32>,
    return
  }
  func.func @transform_0(%arg0: i32) -> (i32, i32) {
    %c0_i32 = arith.constant 0 : i32
    %c0_i32_0 = arith.constant 0 : i32
    return %arg0, %c0_i32 : i32, i32
  }
  func.func @transform_1(%arg0: i32) -> (i32, i32) {
    %c0_i32 = arith.constant 0 : i32
    %c0_i32_0 = arith.constant 0 : i32
    %c0_i32_1 = arith.constant 0 : i32
    return %c0_i32, %c0_i32_0 : i32, i32
  }
  func.func @transform_2(%arg0: i32) -> (i32, i32) {
    %c0_i32 = arith.constant 0 : i32
    %c0_i32_0 = arith.constant 0 : i32
    %c0_i32_1 = arith.constant 0 : i32
    return %c0_i32, %c0_i32_0 : i32, i32
  }
  func.func @transform_3(%arg0: i32) -> (i32, i32) {
    %c0_i32 = arith.constant 0 : i32
    %c0_i32_0 = arith.constant 0 : i32
    return %arg0, %c0_i32 : i32, i32
  }
}

</mosaic_0001>

<llo_original>
// kernel: tpu_custom_call.1
$region0: #{tpu_custom_call.1}
  #allocation0 [shape = 'u32[]', space=smem, size = 0x4, offset = 0x4, fixed_abs, tag = 'smem constant byte address 0x4 - core index']
  #allocation1 [shape = 'u32[144,128]{1,0:T(1,128)}', space=vmem, size = 0x12000, scoped, tag = 'internal scratch']
  %s0 = inlined_call_operand.hbm [shape: f32[1,16], index: 0, kind: input, shape index: {}]
  %s1 = inlined_call_operand.hbm [shape: f32[16,32], index: 1, kind: input, shape index: {}]
  %s2 = inlined_call_operand.vmem [shape: f32[1,32], index: 2, kind: input, shape index: {}]
  %s3 = inlined_call_operand.hbm [shape: f32[1,32], index: 3, kind: output, shape index: {}]
  %s4 = sld [smem:[#allocation0]]
  $region30: #{tpu_custom_call.1} parent=0
    _
  %s6 = ssub.s32 1, %s4
  %s7 = scalar_select 0, %s6, %s4
  $region1: #{tpu_custom_call.1} parent=0
    #allocation2 [shape = 'u8[512]{0}', space=vmem, size = 0x400, scoped, tag = 'input window, operand 0, single buffered']
    #allocation3 [shape = 's32[1]{0}', space=sflag, size = 0x4, scoped, tag = 'scoped memory for tpu_custom_call.1']
    #allocation4 [shape = 's32[1]{0}', space=sflag, size = 0x4, scoped, tag = 'scoped memory for tpu_custom_call.1']
    #allocation5 [shape = 'u8[8192]{0}', space=vmem, size = 0x2000, scoped, tag = 'input window, operand 1, single buffered']
    #allocation6 [shape = 's32[1]{0}', space=sflag, size = 0x4, scoped, tag = 'scoped memory for tpu_custom_call.1']
    #allocation7 [shape = 'u8[512]{0}', space=vmem, size = 0x400, scoped, tag = 'output window, operand 0, single buffered']
    %8 = vsyncpa [#allocation3], 0
    %9 = vsyncpa [#allocation6], 0
    %10 = vsyncpa [#allocation4], 0
    // Predicated region
    $region2: #{tpu_custom_call.1} parent=1 // pred_check
      _
    $region3: #{tpu_custom_call.1} parent=1 // pred_check_branch
      %12 = sbr.rel (0) target = $region5
    $region4: #{tpu_custom_call.1} parent=1 // pred_region
      %s14 = ssub.s32 16, 16
      %15 = vsyncadd [#allocation3], %s14
      %s17 = sshll.u32 [#allocation2], 4
      %s18 = int_to_ptr.vmem [resolvable:$true] %s17
      %20 = dma.hbm_to_vmem [thread:$0]  %s0, 16, %s18, [#allocation3]
    $region5: #{tpu_custom_call.1} parent=1 // pred_fallthru
      _
    // Predicated region
    $region6: #{tpu_custom_call.1} parent=1 // pred_check
      _
    $region7: #{tpu_custom_call.1} parent=1 // pred_check_branch
      %22 = sbr.rel (0) target = $region9
    $region8: #{tpu_custom_call.1} parent=1 // pred_region
      %s24 = ssub.s32 256, 256
      %25 = vsyncadd [#allocation6], %s24
      %s26 = sshll.u32 [#allocation5], 4
      %s27 = int_to_ptr.vmem [resolvable:$true] %s26
      %32 = dma.hbm_to_vmem [thread:$0]  %s1, 256, %s27, [#allocation6], 128, 128, 8
    $region9: #{tpu_custom_call.1} parent=1 // pred_fallthru
      _
    // Predicated region
    $region10: #{tpu_custom_call.1} parent=1 // pred_check
      _
    $region11: #{tpu_custom_call.1} parent=1 // pred_check_branch
      %34 = sbr.rel (0) target = $region13
    $region12: #{tpu_custom_call.1} parent=1 // pred_region
      _
    $region13: #{tpu_custom_call.1} parent=1 // pred_fallthru
      _
    // Predicated region
    $region14: #{tpu_custom_call.1} parent=1 // pred_check
      _
    $region15: #{tpu_custom_call.1} parent=1 // pred_check_branch
      %36 = sbr.rel (0) target = $region17
    $region16: #{tpu_custom_call.1} parent=1 // pred_region
      %37 = dma.done [#allocation3], 16
    $region17: #{tpu_custom_call.1} parent=1 // pred_fallthru
      _
    // Predicated region
    $region18: #{tpu_custom_call.1} parent=1 // pred_check
      _
    $region19: #{tpu_custom_call.1} parent=1 // pred_check_branch
      %39 = sbr.rel (0) target = $region21
    $region20: #{tpu_custom_call.1} parent=1 // pred_region
      %40 = dma.done [#allocation6], 256
    $region21: #{tpu_custom_call.1} parent=1 // pred_fallthru
      _
    %v41 = vld [vmem:[#allocation2] sm:$0x1]
    %v42 = vld [vmem:[#allocation5] sm:$0xff]
    %v43 = vld [vmem:[#allocation5 + $0x8] sm:$0xff]
    %v44 = vld [vmem:[%s2] sm:$0x1]
    %vm45 = vcmask 130048
    %v47 = vsel %vm45, %v41, 0
    %49 = vmatprep.subr.mxu0 0.0
    %50 = vmatpush1.msra.mxu0 %v42
    %51 = vmatprep.subr.mxu0 0.0
    %52 = vmatpush1.msra.mxu0 %v43
    %53 = vmatprep.subr.mxu0 0.0
    %54 = vmatpush1.msra.mxu0 0.0
    %55 = vmatprep.subr.mxu0 0.0
    %56 = vmatpush1.msra.mxu0 0.0
    %57 = vmatprep.subr.mxu0 0.0
    %58 = vmatpush1.msra.mxu0 0.0
    %59 = vmatprep.subr.mxu0 0.0
    %60 = vmatpush1.msra.mxu0 0.0
    %61 = vmatprep.subr.mxu0 0.0
    %62 = vmatpush1.msra.mxu0 0.0
    %63 = vmatprep.subr.mxu0 0.0
    %64 = vmatpush1.msra.mxu0 0.0
    %65 = vmatprep.subr.mxu0 0.0
    %66 = vmatpush1.msra.mxu0 0.0
    %67 = vmatprep.subr.mxu0 0.0
    %68 = vmatpush1.msra.mxu0 0.0
    %69 = vmatprep.subr.mxu0 0.0
    %70 = vmatpush1.msra.mxu0 0.0
    %71 = vmatprep.subr.mxu0 0.0
    %72 = vmatpush1.msra.mxu0 0.0
    %73 = vmatprep.subr.mxu0 0.0
    %74 = vmatpush1.msra.mxu0 0.0
    %75 = vmatprep.subr.mxu0 0.0
    %76 = vmatpush1.msra.mxu0 0.0
    %77 = vmatprep.subr.mxu0 0.0
    %78 = vmatpush1.msra.mxu0 0.0
    %79 = vmatprep.subr.mxu0 0.0
    %80 = vmatpush1.msra.mxu0 0.0
    %81 = vmatprep.subr.mxu0 0.0
    %82 = vmatpush1.msra.mxu0 0.0
    %83 = vmatprep.subr.mxu0 0.0
    %84 = vmatpush1.msra.mxu0 0.0
    %85 = vmatprep.subr.mxu0 0.0
    %86 = vmatpush1.msra.mxu0 0.0
    %87 = vmatprep.subr.mxu0 0.0
    %88 = vmatpush1.msra.mxu0 0.0
    %89 = vmatprep.subr.mxu0 0.0
    %90 = vmatpush1.msra.mxu0 0.0
    %91 = vmatprep.subr.mxu0 0.0
    %92 = vmatpush1.msra.mxu0 0.0
    %93 = vmatprep.subr.mxu0 0.0
    %94 = vmatpush1.msra.mxu0 0.0
    %95 = vmatprep.subr.mxu0 0.0
    %96 = vmatpush1.msra.mxu0 0.0
    %97 = vmatprep.subr.mxu0 0.0
    %98 = vmatpush1.msra.mxu0 0.0
    %99 = vmatprep.subr.mxu0 0.0
    %100 = vmatpush1.msra.mxu0 0.0
    %101 = vmatprep.subr.mxu0 0.0
    %102 = vmatpush1.msra.mxu0 0.0
    %103 = vmatprep.subr.mxu0 0.0
    %104 = vmatpush1.msra.mxu0 0.0
    %105 = vmatprep.subr.mxu0 0.0
    %106 = vmatpush1.msra.mxu0 0.0
    %107 = vmatprep.subr.mxu0 0.0
    %108 = vmatpush1.msra.mxu0 0.0
    %109 = vmatprep.subr.mxu0 0.0
    %110 = vmatpush1.msra.mxu0 0.0
    %111 = vmatprep.subr.mxu0 0.0
    %112 = vmatpush1.msra.mxu0 0.0
    %113 = vmatprep.mubr.f32.mxu0 0.0
    %114 = vmatmul.mubr.f32.gmra.mrb[0].mxu0 %v47
    %v115 = vpop.f32.mrb[0].mxu0
    %v116 = vadd.f32 %v44, %v115
    %v117 = vpop.f32.mrb[0].mxu0
    %118 = vdwg.mxu0
    %v119 = vmax.f32 %v116, 1.0
    %v120 = vmin.f32 %v119, 3.0
    %vm121 = vcmask 253952
    %122 = vst.msk [vmem:[#allocation7] sm:$0x1] %vm121, %v120
    // Predicated region
    $region22: #{tpu_custom_call.1} parent=1 // pred_check
      _
    $region23: #{tpu_custom_call.1} parent=1 // pred_check_branch
      %124 = sbr.rel (0) target = $region25
    $region24: #{tpu_custom_call.1} parent=1 // pred_region
      %s126 = ssub.s32 16, 16
      %127 = vsyncadd [#allocation4], %s126
      %s129 = sshll.u32 [#allocation7], 4
      %s130 = int_to_ptr.vmem [resolvable:$true] %s129
      %132 = dma.vmem_to_hbm [thread:$0]  %s130, 16, %s3, [#allocation4]
    $region25: #{tpu_custom_call.1} parent=1 // pred_fallthru
      _
    // Predicated region
    $region26: #{tpu_custom_call.1} parent=1 // pred_check
      _
    $region27: #{tpu_custom_call.1} parent=1 // pred_check_branch
      %134 = sbr.rel (0) target = $region29
    $region28: #{tpu_custom_call.1} parent=1 // pred_region
      %135 = dma.done [#allocation4], 16
    $region29: #{tpu_custom_call.1} parent=1 // pred_fallthru
      _
    %136 = vsyncpa [#allocation3], 1
    %137 = vsyncpa [#allocation6], 1
    %138 = vsyncpa [#allocation4], 1

</llo_original>
